<compile_context>
chip_gen: v5e
topology: v5e:2x2
jax: 0.10.0
libtpu: 0.0.40
codegen_flags: <defaults>
</compile_context>

<pallas_src>
import math

import jax
import jax.numpy as jnp
from jax.experimental import pallas as pl
from jax.experimental.pallas import tpu as pltpu


def _cdiv(a, b):
    return -(-a // b)


def _round_up(x, m):
    return _cdiv(x, m) * m


def _posenc_kernel(t_ref, s_ref, phase_ref, out_ref):
    # t_ref:     (bs, R)  compact time values (R consecutive time steps / row)
    # s_ref:     (R, W)   resident block-diagonal expand-and-scale matrix
    # phase_ref: (1, W)   resident phase row: 0 on sin lanes, pi/2 on cos lanes
    # out_ref:   (bs, W)  lane-dense output tile (W % 128 == 0)
    #
    # MXU does the lane-repeat + per-channel scale in one shot (idle unit,
    # hidden under the output DMA).  HIGHEST precision keeps z f32-accurate.
    z = jnp.dot(
        t_ref[...],
        s_ref[...],
        preferred_element_type=jnp.float32,
        precision=jax.lax.Precision.HIGHEST,
    )
    # Single transcendental per element: cos(z) == sin(z + pi/2).
    out_ref[...] = jnp.sin(z + phase_ref[...])


@jax.jit
def positional_encoding(t, scales):
    """PositionalEncoder.forward: t (...,) -> (..., 2 * len(scales))."""
    assert scales.ndim == 1, "scales must be a 1-D array"
    orig_shape = t.shape
    d_half = scales.shape[0]
    num_dim = 2 * d_half
    assert num_dim >= 2, "num_dim must be a positive even number"

    t_flat = jnp.reshape(t, (-1,)).astype(jnp.float32)
    n = t_flat.shape[0]
    if n == 0:
        return jnp.zeros(orig_shape + (num_dim,), jnp.float32)

    # Lane-dense output view: (N, num_dim) row-major seen as (N//R, R*num_dim)
    # with W = R*num_dim a multiple of 128.  Keep R minimal (small padding),
    # but >= 8 so the MXU contraction dim is non-degenerate.
    r_unit = 128 // math.gcd(num_dim, 128)
    R = r_unit * max(1, _cdiv(8, r_unit))
    W = R * num_dim                                   # multiple of 128

    n_outer = _cdiv(n, R)

    # ~4 MiB output tile per buffer -> double-buffered out (8 MiB) + compact-t
    # (num_dim x smaller) + resident constants ~9-10 MiB total: fits the
    # scoped-VMEM defaults on v5e/v6e/v7x without raising vmem_limit_bytes.
    bs_cap = max(8, ((4 * 1024 * 1024) // (W * 4)) // 8 * 8)
    ngrid = _cdiv(n_outer, bs_cap)
    # On large inputs keep >= 8 grid steps so v7x's two TensorCores both get
    # work under dimension_semantics=("parallel",).
    if n_outer * W * 4 >= 8 * (512 * 1024):
        ngrid = max(ngrid, 8)
    bs = min(bs_cap, _round_up(_cdiv(n_outer, ngrid), 8))
    n_outer_pad = _round_up(n_outer, bs)
    n_pad = n_outer_pad * R

    # Compact time input (N*4 bytes) -- the output-sized broadcast is gone.
    if n_pad != n:
        t_flat = jnp.pad(t_flat, (0, n_pad - n))
    t_small = jnp.reshape(t_flat, (n_outer_pad, R))

    # Resident constants (DMA'd once thanks to constant index_maps).
    scales_f32 = scales.astype(jnp.float32)
    s_ext = jnp.concatenate([scales_f32, scales_f32])             # (num_dim,)
    # S[r, r*num_dim + k] = s_ext[k]; zero elsewhere.
    S = (jnp.eye(R, dtype=jnp.float32)[:, :, None]
         * s_ext[None, None, :]).reshape(R, W)
    phase = jnp.concatenate([
        jnp.zeros((d_half,), jnp.float32),
        jnp.full((d_half,), math.pi / 2.0, jnp.float32),
    ])                                                            # (num_dim,)
    phase_row = jnp.reshape(jnp.tile(phase, (R,)), (1, W))

    grid = (n_outer_pad // bs,)

    out = pl.pallas_call(
        _posenc_kernel,
        out_shape=jax.ShapeDtypeStruct((n_outer_pad, W), jnp.float32),
        grid_spec=pltpu.PrefetchScalarGridSpec(
            num_scalar_prefetch=0,
            grid=grid,
            in_specs=[
                pl.BlockSpec((bs, R), lambda i: (i, 0)),   # compact time values
                pl.BlockSpec((R, W), lambda i: (0, 0)),    # expand/scale matrix
                pl.BlockSpec((1, W), lambda i: (0, 0)),    # phase row
            ],
            out_specs=pl.BlockSpec((bs, W), lambda i: (i, 0)),
        ),
        compiler_params=pltpu.CompilerParams(
            dimension_semantics=("parallel",),
        ),
    )(t_small, S, phase_row)

    out = jnp.reshape(out, (n_pad, num_dim))
    if n_pad != n:
        # One extra output-sized pass only when padding triggers; callers whose
        # N divides the block coverage (bs * R) skip this entirely.
        out = out[:n]
    return jnp.reshape(out, orig_shape + (num_dim,))


def positional_encoding_ref(t, scales):
    """Pure-JAX reference matching the PyTorch forward."""
    z = t[..., None] * scales
    return jnp.concatenate([jnp.sin(z), jnp.cos(z)], axis=-1)


if __name__ == "__main__":
    num_dim = 8                      # must be even (module asserts)
    scale = 10.0
    d_half = num_dim // 2

    # scales = scale ** (-2k / (num_dim - 2)); scales[0] == 1.0
    scales = scale ** (-2.0 * jnp.arange(d_half, dtype=jnp.float32)
                       / (num_dim - 2))

    key = jax.random.PRNGKey(0)
    k0, k1 = jax.random.split(key)

    # Example: batch=2, seq=8 -> output (2, 8, num_dim)
    t = jax.random.normal(k0, (2, 8), dtype=jnp.float32)
    out = jax.block_until_ready(positional_encoding(t, scales))
    ref = positional_encoding_ref(t, scales)
    assert out.shape == (2, 8, num_dim), out.shape
    assert jnp.allclose(out, ref, atol=1e-5, rtol=1e-5), "mismatch vs reference"

    # Ragged size exercising the padded-tail path: (3, 7) -> (3, 7, num_dim)
    t2 = jax.random.normal(k1, (3, 7), dtype=jnp.float32)
    out2 = jax.block_until_ready(positional_encoding(t2, scales))
    ref2 = positional_encoding_ref(t2, scales)
    assert out2.shape == (3, 7, num_dim), out2.shape
    assert jnp.allclose(out2, ref2, atol=1e-5, rtol=1e-5), "mismatch vs reference"

    # TODO(synk): inverse() (asin of channel 0) is a trivial decode, not part
    # of the forward pass; not implemented as a kernel.
    print("KERNEL_OK")
</pallas_src>

<mosaic_0001>
module attributes {stable_mosaic.version = 11 : i64} {
  func.func @_posenc_kernel(%arg0: i32, %arg1: memref<8x16xf32, #tpu.memory_space<vmem>>, %arg2: memref<16x128xf32, #tpu.memory_space<vmem>>, %arg3: memref<1x128xf32, #tpu.memory_space<vmem>>, %arg4: memref<8x128xf32, #tpu.memory_space<vmem>>) attributes {dimension_semantics = [#tpu.dimension_semantics<parallel>], iteration_bounds = array<i64: 1>, scalar_prefetch = 0 : i64, scratch_operands = 0 : i64, tpu.core_type = #tpu.core_type<tc>, window_params = [{transform_indices = @transform_0, window_bounds = array<i64: 8, 16>}, {pipeline_mode = #tpu.pipeline_mode<synchronous>, transform_indices = @transform_1, window_bounds = array<i64: 16, 128>}, {pipeline_mode = #tpu.pipeline_mode<synchronous>, transform_indices = @transform_2, window_bounds = array<i64: 1, 128>}, {transform_indices = @transform_3, window_bounds = array<i64: 8, 128>}]} {
    %c0 = arith.constant 0 : index
    %c0_0 = arith.constant 0 : index
    %0 = vector.load %arg1[%c0, %c0_0] : memref<8x16xf32, #tpu.memory_space<vmem>>, vector<8x16xf32>
    %c0_1 = arith.constant 0 : index
    %c0_2 = arith.constant 0 : index
    %1 = vector.load %arg2[%c0_1, %c0_2] : memref<16x128xf32, #tpu.memory_space<vmem>>, vector<16x128xf32>
    %cst = arith.constant dense<0.000000e+00> : vector<8x128xf32>
    %2 = tpu.matmul %0, %1, %cst {dimension_numbers = #tpu.dot_dimension_numbers<[1], [0], [0], [1], [0, 0, 1, 1], [], []>, precision = #tpu.contract_precision<fp32>} : vector<8x16xf32>, vector<16x128xf32>, vector<8x128xf32> -> vector<8x128xf32>
    %c0_3 = arith.constant 0 : index
    %c0_4 = arith.constant 0 : index
    %3 = vector.load %arg3[%c0_3, %c0_4] : memref<1x128xf32, #tpu.memory_space<vmem>>, vector<1x128xf32>
    %4 = vector.broadcast %3 : vector<1x128xf32> to vector<8x128xf32>
    %5 = arith.addf %2, %4 : vector<8x128xf32>
    %6 = math.sin %5 : vector<8x128xf32>
    %c0_5 = arith.constant 0 : index
    %c0_6 = arith.constant 0 : index
    %7 = vector.load %arg4[%c0_5, %c0_6] : memref<8x128xf32, #tpu.memory_space<vmem>>, vector<8x128xf32>
    tpu.vector_store %arg4[%c0_5, %c0_6], %6 {strides = array<i32>} : memref<8x128xf32, #tpu.memory_space<vmem>>, vector<8x128xf32>,
    return
  }
  func.func @transform_0(%arg0: i32) -> (i32, i32) {
    %c0_i32 = arith.constant 0 : i32
    %c0_i32_0 = arith.constant 0 : i32
    return %arg0, %c0_i32 : i32, i32
  }
  func.func @transform_1(%arg0: i32) -> (i32, i32) {
    %c0_i32 = arith.constant 0 : i32
    %c0_i32_0 = arith.constant 0 : i32
    %c0_i32_1 = arith.constant 0 : i32
    return %c0_i32, %c0_i32_0 : i32, i32
  }
  func.func @transform_2(%arg0: i32) -> (i32, i32) {
    %c0_i32 = arith.constant 0 : i32
    %c0_i32_0 = arith.constant 0 : i32
    %c0_i32_1 = arith.constant 0 : i32
    return %c0_i32, %c0_i32_0 : i32, i32
  }
  func.func @transform_3(%arg0: i32) -> (i32, i32) {
    %c0_i32 = arith.constant 0 : i32
    %c0_i32_0 = arith.constant 0 : i32
    return %arg0, %c0_i32 : i32, i32
  }
}

</mosaic_0001>

<llo_original>
// kernel: tile.7
$region0: #{tile.7}
  %s0 = inlined_call_operand.vmem [shape: f32[16,8], index: 0, kind: input, shape index: {}]
  %s1 = inlined_call_operand.vmem [shape: f32[1,128], index: 1, kind: output, shape index: {}]
  $region1: #{tile.7} parent=0
    #allocation0 [shape = 'u8[4096]{0}', space=vmem, size = 0x1000, scoped, tag = 'scoped mem for output reshape']
    %v2 = vld [vmem:[%s0] sm:$0x1]
    %vm3 = vcmask 64512
    %4 = vst.msk [vmem:[#allocation0] sm:$0x1] %vm3, %v2
    %s5 = scalar_lea.vmem %s0, 15
    %v6 = vld [vmem:[%s5] sm:$0x1]
    %7 = vrot.lane.b32.xlu0 %v6, 120
    %v8 = vpop.permute.xlu0 %7
    %vm9 = vcmask 1048512
    %10 = vst.msk [vmem:[#allocation0] sm:$0x1] %vm9, %v8
    %s11 = scalar_lea.vmem %s0, 14
    %v12 = vld [vmem:[%s11] sm:$0x1]
    %13 = vrot.lane.b32.xlu0 %v12, 112
    %v14 = vpop.permute.xlu0 %13
    %vm15 = vcmask 982912
    %16 = vst.msk [vmem:[#allocation0] sm:$0x1] %vm15, %v14
    %s17 = scalar_lea.vmem %s0, 13
    %v18 = vld [vmem:[%s17] sm:$0x1]
    %19 = vrot.lane.b32.xlu0 %v18, 104
    %v20 = vpop.permute.xlu0 %19
    %vm21 = vcmask 917312
    %22 = vst.msk [vmem:[#allocation0] sm:$0x1] %vm21, %v20
    %s23 = scalar_lea.vmem %s0, 12
    %v24 = vld [vmem:[%s23] sm:$0x1]
    %25 = vrot.lane.b32.xlu0 %v24, 96
    %v26 = vpop.permute.xlu0 %25
    %vm27 = vcmask 851712
    %28 = vst.msk [vmem:[#allocation0] sm:$0x1] %vm27, %v26
    %s29 = scalar_lea.vmem %s0, 11
    %v30 = vld [vmem:[%s29] sm:$0x1]
    %31 = vrot.lane.b32.xlu0 %v30, 88
    %v32 = vpop.permute.xlu0 %31
    %vm33 = vcmask 786112
    %34 = vst.msk [vmem:[#allocation0] sm:$0x1] %vm33, %v32
    %s35 = scalar_lea.vmem %s0, 10
    %v36 = vld [vmem:[%s35] sm:$0x1]
    %37 = vrot.lane.b32.xlu0 %v36, 80
    %v38 = vpop.permute.xlu0 %37
    %vm39 = vcmask 720512
    %40 = vst.msk [vmem:[#allocation0] sm:$0x1] %vm39, %v38
    %s41 = scalar_lea.vmem %s0, 9
    %v42 = vld [vmem:[%s41] sm:$0x1]
    %43 = vrot.lane.b32.xlu0 %v42, 72
    %v44 = vpop.permute.xlu0 %43
    %vm45 = vcmask 654912
    %46 = vst.msk [vmem:[#allocation0] sm:$0x1] %vm45, %v44
    %s47 = scalar_lea.vmem %s0, 8
    %v48 = vld [vmem:[%s47] sm:$0x1]
    %49 = vrot.lane.b32.xlu0 %v48, 64
    %v50 = vpop.permute.xlu0 %49
    %vm51 = vcmask 589312
    %52 = vst.msk [vmem:[#allocation0] sm:$0x1] %vm51, %v50
    %s53 = scalar_lea.vmem %s0, 7
    %v54 = vld [vmem:[%s53] sm:$0x1]
    %55 = vrot.lane.b32.xlu0 %v54, 56
    %v56 = vpop.permute.xlu0 %55
    %vm57 = vcmask 523712
    %58 = vst.msk [vmem:[#allocation0] sm:$0x1] %vm57, %v56
    %s59 = scalar_lea.vmem %s0, 6
    %v60 = vld [vmem:[%s59] sm:$0x1]
    %61 = vrot.lane.b32.xlu0 %v60, 48
    %v62 = vpop.permute.xlu0 %61
    %vm63 = vcmask 458112
    %64 = vst.msk [vmem:[#allocation0] sm:$0x1] %vm63, %v62
    %s65 = scalar_lea.vmem %s0, 5
    %v66 = vld [vmem:[%s65] sm:$0x1]
    %67 = vrot.lane.b32.xlu0 %v66, 40
    %v68 = vpop.permute.xlu0 %67
    %vm69 = vcmask 392512
    %70 = vst.msk [vmem:[#allocation0] sm:$0x1] %vm69, %v68
    %s71 = scalar_lea.vmem %s0, 4
    %v72 = vld [vmem:[%s71] sm:$0x1]
    %73 = vrot.lane.b32.xlu0 %v72, 32
    %v74 = vpop.permute.xlu0 %73
    %vm75 = vcmask 326912
    %76 = vst.msk [vmem:[#allocation0] sm:$0x1] %vm75, %v74
    %s77 = scalar_lea.vmem %s0, 3
    %v78 = vld [vmem:[%s77] sm:$0x1]
    %79 = vrot.lane.b32.xlu0 %v78, 24
    %v80 = vpop.permute.xlu0 %79
    %vm81 = vcmask 261312
    %82 = vst.msk [vmem:[#allocation0] sm:$0x1] %vm81, %v80
    %s83 = scalar_lea.vmem %s0, 2
    %v84 = vld [vmem:[%s83] sm:$0x1]
    %85 = vrot.lane.b32.xlu0 %v84, 16
    %v86 = vpop.permute.xlu0 %85
    %vm87 = vcmask 195712
    %88 = vst.msk [vmem:[#allocation0] sm:$0x1] %vm87, %v86
    %s89 = scalar_lea.vmem %s0, 1
    %v90 = vld [vmem:[%s89] sm:$0x1]
    %91 = vrot.lane.b32.xlu0 %v90, 8
    %v92 = vpop.permute.xlu0 %91
    %vm93 = vcmask 130112
    %94 = vst.msk [vmem:[#allocation0] sm:$0x1] %vm93, %v92
    %s96 = ssub.s32 2, 1
    %v97 = vld [vmem:[#allocation0] sm:%s96]
    %s99 = ssub.s32 2, 1
    %100 = vst [vmem:[%s1] sm:%s99] %v97

// kernel: positional_encoding.1
$region0: #{positional_encoding.1}
  #allocation0 [shape = 'u32[]', space=smem, size = 0x4, offset = 0x4, fixed_abs, tag = 'smem constant byte address 0x4 - core index']
  #allocation1 [shape = 'u32[72,128]{1,0:T(1,128)}', space=vmem, size = 0x9000, scoped, tag = 'internal scratch']
  %s0 = inlined_call_operand.vmem [shape: f32[8,16], index: 0, kind: input, shape index: {}]
  %s1 = inlined_call_operand.vmem [shape: f32[16,128], index: 1, kind: input, shape index: {}]
  %s2 = inlined_call_operand.vmem [shape: f32[1,128], index: 2, kind: input, shape index: {}]
  %s3 = inlined_call_operand.vmem [shape: f32[8,128], index: 3, kind: output, shape index: {}]
  %s4 = sld [smem:[#allocation0]]
  $region22: #{positional_encoding.1} parent=0
    _
  %s6 = ssub.s32 1, %s4
  %s7 = scalar_select 0, %s6, %s4
  // Predicated region
  $region2: #{positional_encoding.1} parent=0 // pred_check
    _
  $region3: #{positional_encoding.1} parent=0 // pred_check_branch
    %9 = sbr.rel (0) target = $region5
  $region4: #{positional_encoding.1} parent=0 // pred_region
    _
  $region5: #{positional_encoding.1} parent=0 // pred_fallthru
    _
  // Predicated region
  $region6: #{positional_encoding.1} parent=0 // pred_check
    _
  $region7: #{positional_encoding.1} parent=0 // pred_check_branch
    %11 = sbr.rel (0) target = $region9
  $region8: #{positional_encoding.1} parent=0 // pred_region
    _
  $region9: #{positional_encoding.1} parent=0 // pred_fallthru
    _
  // Predicated region
  $region10: #{positional_encoding.1} parent=0 // pred_check
    _
  $region11: #{positional_encoding.1} parent=0 // pred_check_branch
    %13 = sbr.rel (0) target = $region13
  $region12: #{positional_encoding.1} parent=0 // pred_region
    _
  $region13: #{positional_encoding.1} parent=0 // pred_fallthru
    _
  %v14 = vld [vmem:[%s0] sm:$0xff]
  %v15 = vld [vmem:[%s1] sm:$0xff]
  %v16 = vld [vmem:[%s1 + $0x8] sm:$0xff]
  %v17 = vld [vmem:[%s2] sm:$0x1]
  %v19 = vperm.slane %v17, 0
  %vm21 = vcmask 130048
  %v23 = vsel %vm21, %v14, 0
  %25 = vmatpush.msra.mxu0 0.0
  %26 = vmatpush.msra.mxu0 0.0
  %27 = vmatpush.msra.mxu0 0.0
  %28 = vmatpush.msra.mxu0 0.0
  %29 = vmatpush.msra.mxu0 0.0
  %30 = vmatpush.msra.mxu0 0.0
  %31 = vmatpush.msra.mxu0 0.0
  %32 = vmatpush.msra.mxu0 0.0
  %33 = vmatpush.msra.mxu0 0.0
  %34 = vmatpush.msra.mxu0 0.0
  %35 = vmatpush.msra.mxu0 0.0
  %36 = vmatpush.msra.mxu0 0.0
  %37 = vmatpush.msra.mxu0 0.0
  %38 = vmatpush.msra.mxu0 0.0
  %v39 = vand.u32 %v16, 4294901760
  %40 = vmatpush.msra.mxu0 %v39
  %v41 = vand.u32 %v15, 4294901760
  %42 = vmatpush.msra.mxu0 %v41
  %v43 = vand.u32 %v23, 4294901760
  %v44 = vsub.f32 %v23, %v43
  %v45 = vand.u32 %v44, 4294901760
  %v46 = vsub.f32 %v44, %v45
  %v47 = vand.u32 %v46, 4294901760
  %48 = vmatmul.f32.gmra.mxu0 %v47
  %v49 = vpop.f32.mrf.mxu0
  %v50 = vadd.f32 %v19, %v49
  %51 = vdwg.mxu0
  %52 = vmatpush.msra.mxu0 0.0
  %53 = vmatpush.msra.mxu0 0.0
  %54 = vmatpush.msra.mxu0 0.0
  %55 = vmatpush.msra.mxu0 0.0
  %56 = vmatpush.msra.mxu0 0.0
  %57 = vmatpush.msra.mxu0 0.0
  %58 = vmatpush.msra.mxu0 0.0
  %59 = vmatpush.msra.mxu0 0.0
  %60 = vmatpush.msra.mxu0 0.0
  %61 = vmatpush.msra.mxu0 0.0
  %62 = vmatpush.msra.mxu0 0.0
  %63 = vmatpush.msra.mxu0 0.0
  %64 = vmatpush.msra.mxu0 0.0
  %65 = vmatpush.msra.mxu0 0.0
  %v66 = vand.u32 %v16, 4294901760
  %v67 = vsub.f32 %v16, %v66
  %v68 = vand.u32 %v67, 4294901760
  %v69 = vsub.f32 %v67, %v68
  %v70 = vand.u32 %v69, 4294901760
  %71 = vmatpush.msra.mxu0 %v70
  %v72 = vand.u32 %v15, 4294901760
  %v73 = vsub.f32 %v15, %v72
  %v74 = vand.u32 %v73, 4294901760
  %v75 = vsub.f32 %v73, %v74
  %v76 = vand.u32 %v75, 4294901760
  %77 = vmatpush.msra.mxu0 %v76
  %v78 = vand.u32 %v23, 4294901760
  %79 = vmatmul.f32.gmra.mxu0 %v78
  %v80 = vpop.f32.mrf.mxu0
  %v81 = vadd.f32 %v50, %v80
  %82 = vdwg.mxu0
  %83 = vmatpush.msra.mxu0 0.0
  %84 = vmatpush.msra.mxu0 0.0
  %85 = vmatpush.msra.mxu0 0.0
  %86 = vmatpush.msra.mxu0 0.0
  %87 = vmatpush.msra.mxu0 0.0
  %88 = vmatpush.msra.mxu0 0.0
  %89 = vmatpush.msra.mxu0 0.0
  %90 = vmatpush.msra.mxu0 0.0
  %91 = vmatpush.msra.mxu0 0.0
  %92 = vmatpush.msra.mxu0 0.0
  %93 = vmatpush.msra.mxu0 0.0
  %94 = vmatpush.msra.mxu0 0.0
  %95 = vmatpush.msra.mxu0 0.0
  %96 = vmatpush.msra.mxu0 0.0
  %v97 = vand.u32 %v16, 4294901760
  %v98 = vsub.f32 %v16, %v97
  %99 = vmatpush.msra.mxu0 %v98
  %v100 = vand.u32 %v15, 4294901760
  %v101 = vsub.f32 %v15, %v100
  %102 = vmatpush.msra.mxu0 %v101
  %v103 = vand.u32 %v23, 4294901760
  %v104 = vsub.f32 %v23, %v103
  %105 = vmatmul.f32.gmra.mxu0 %v104
  %v106 = vpop.f32.mrf.mxu0
  %v107 = vadd.f32 %v81, %v106
  %108 = vdwg.mxu0
  %109 = vmatpush.msra.mxu0 0.0
  %110 = vmatpush.msra.mxu0 0.0
  %111 = vmatpush.msra.mxu0 0.0
  %112 = vmatpush.msra.mxu0 0.0
  %113 = vmatpush.msra.mxu0 0.0
  %114 = vmatpush.msra.mxu0 0.0
  %115 = vmatpush.msra.mxu0 0.0
  %116 = vmatpush.msra.mxu0 0.0
  %117 = vmatpush.msra.mxu0 0.0
  %118 = vmatpush.msra.mxu0 0.0
  %119 = vmatpush.msra.mxu0 0.0
  %120 = vmatpush.msra.mxu0 0.0
  %121 = vmatpush.msra.mxu0 0.0
  %122 = vmatpush.msra.mxu0 0.0
  %v123 = vand.u32 %v16, 4294901760
  %124 = vmatpush.msra.mxu0 %v123
  %v125 = vand.u32 %v15, 4294901760
  %126 = vmatpush.msra.mxu0 %v125
  %v127 = vand.u32 %v23, 4294901760
  %v128 = vsub.f32 %v23, %v127
  %v129 = vand.u32 %v128, 4294901760
  %130 = vmatmul.f32.gmra.mxu0 %v129
  %v131 = vpop.f32.mrf.mxu0
  %v132 = vadd.f32 %v107, %v131
  %133 = vdwg.mxu0
  %134 = vmatpush.msra.mxu0 0.0
  %135 = vmatpush.msra.mxu0 0.0
  %136 = vmatpush.msra.mxu0 0.0
  %137 = vmatpush.msra.mxu0 0.0
  %138 = vmatpush.msra.mxu0 0.0
  %139 = vmatpush.msra.mxu0 0.0
  %140 = vmatpush.msra.mxu0 0.0
  %141 = vmatpush.msra.mxu0 0.0
  %142 = vmatpush.msra.mxu0 0.0
  %143 = vmatpush.msra.mxu0 0.0
  %144 = vmatpush.msra.mxu0 0.0
  %145 = vmatpush.msra.mxu0 0.0
  %146 = vmatpush.msra.mxu0 0.0
  %147 = vmatpush.msra.mxu0 0.0
  %v148 = vand.u32 %v16, 4294901760
  %v149 = vsub.f32 %v16, %v148
  %v150 = vand.u32 %v149, 4294901760
  %151 = vmatpush.msra.mxu0 %v150
  %v152 = vand.u32 %v15, 4294901760
  %v153 = vsub.f32 %v15, %v152
  %v154 = vand.u32 %v153, 4294901760
  %155 = vmatpush.msra.mxu0 %v154
  %v156 = vand.u32 %v23, 4294901760
  %157 = vmatmul.f32.gmra.mxu0 %v156
  %v158 = vpop.f32.mrf.mxu0
  %v159 = vadd.f32 %v132, %v158
  %160 = vdwg.mxu0
  %161 = vmatpush.msra.mxu0 0.0
  %162 = vmatpush.msra.mxu0 0.0
  %163 = vmatpush.msra.mxu0 0.0
  %164 = vmatpush.msra.mxu0 0.0
  %165 = vmatpush.msra.mxu0 0.0
  %166 = vmatpush.msra.mxu0 0.0
  %167 = vmatpush.msra.mxu0 0.0
  %168 = vmatpush.msra.mxu0 0.0
  %169 = vmatpush.msra.mxu0 0.0
  %170 = vmatpush.msra.mxu0 0.0
  %171 = vmatpush.msra.mxu0 0.0
  %172 = vmatpush.msra.mxu0 0.0
  %173 = vmatpush.msra.mxu0 0.0
  %174 = vmatpush.msra.mxu0 0.0
  %v175 = vand.u32 %v16, 4294901760
  %176 = vmatpush.msra.mxu0 %v175
  %v177 = vand.u32 %v15, 4294901760
  %178 = vmatpush.msra.mxu0 %v177
  %v179 = vand.u32 %v23, 4294901760
  %180 = vmatmul.f32.gmra.mxu0 %v179
  %v181 = vpop.f32.mrf.mxu0
  %v182 = vadd.f32 %v159, %v181
  %183 = vdwg.mxu0
  %v184 = vand.u32 2147483647, %v182
  %vm185 = vcmp.le.f32.partialorder %v184, 0.7853982
  %vm186 = vcmp.lt.s32.totalorder %v182, 0
  %v187 = vand.u32 %v182, 2139095040
  %v188 = vshrl.u32 %v187, 23
  %v189 = vsub.s32 %v188, 127
  %v190 = vand.u32 2147483647, %v182
  %v191 = vand.u32 %v190, 8388607
  %v192 = vor.u32 %v191, 8388608
  %v193 = vsub.s32 0, %v192
  %v194 = vadd.s32 %v189, 1
  %vm195 = vcmp.gt.s32.totalorder %v194, 0
  %v196 = vsel %vm195, %v194, 0
  %v197 = vshrl.u32 %v196, 5
  %v198 = vand.u32 %v196, 31
  %v199 = vsub.s32 32, %v198
  %v200 = vshrl.u32 683565275, %v199
  %v201 = vshll.u32 683565275, %v198
  %v202 = vshrl.u32 2475754826, %v199
  %v203 = vor.u32 %v201, %v202
  %v204 = vshll.u32 2475754826, %v198
  %v205 = vshrl.u32 2131351028, %v199
  %v206 = vor.u32 %v204, %v205
  %v207 = vshll.u32 2131351028, %v198
  %v208 = vshrl.u32 2102212464, %v199
  %v209 = vor.u32 %v207, %v208
  %v210 = vshll.u32 2102212464, %v198
  %v211 = vshrl.u32 920167782, %v199
  %v212 = vor.u32 %v210, %v211
  %v213 = vshll.u32 920167782, %v198
  %v214 = vshrl.u32 1326507024, %v199
  %v215 = vor.u32 %v213, %v214
  %vm216 = vcmp.lt.s32.totalorder %v197, 1
  %vm217 = vcmp.lt.s32.totalorder %v197, 2
  %vm218 = vcmp.lt.s32.totalorder %v197, 3
  %vm219 = vcmp.lt.s32.totalorder %v197, 4
  %v220 = vsel %vm216, %v200, %v203
  %v221 = vsel %vm219, %v209, 2102212464
  %v222 = vsel %vm218, %v206, %v221
  %v223 = vsel %vm217, %v220, %v222
  %v224 = vsel %vm216, %v203, %v206
  %v225 = vsel %vm219, %v212, 920167782
  %v226 = vsel %vm218, %v209, %v225
  %v227 = vsel %vm217, %v224, %v226
  %v228 = vsel %vm216, %v206, %v209
  %v229 = vsel %vm219, %v215, 1326507024
  %v230 = vsel %vm218, %v212, %v229
  %v231 = vsel %vm217, %v228, %v230
  %v232 = vshll.u32 %v192, 8
  %v233 = vand.u32 %v232, 65535
  %v234 = vshrl.u32 %v232, 16
  %v235 = vand.u32 %v231, 65535
  %v236 = vshrl.u32 %v231, 16
  %v237 = vmul.u32 %v233, %v235
  %v238 = vmul.u32 %v233, %v236
  %v239 = vmul.u32 %v234, %v235
  %v240 = vmul.u32 %v234, %v236
  %v241 = vshll.u32 %v238, 16
  %v242 = vshrl.u32 %v238, 16
  %v243 = vshll.u32 %v239, 16
  %v244 = vshrl.u32 %v239, 16
  %vm245 = vc.u32 %v237, %v241
  %v246 = vsel %vm245, 1, 0
  %v247 = vadd.s32 %v237, %v241
  %v248 = vadd.s32 %v240, %v246
  %vm249 = vc.u32 %v247, %v243
  %v250 = vsel %vm249, 1, 0
  %v251 = vadd.s32 %v247, %v243
  %v252 = vadd.s32 %v248, %v250
  %v253 = vadd.s32 %v252, %v242
  %v254 = vadd.s32 %v253, %v244
  %v255 = vand.u32 %v232, 65535
  %v256 = vshrl.u32 %v232, 16
  %v257 = vand.u32 %v227, 65535
  %v258 = vshrl.u32 %v227, 16
  %v259 = vmul.u32 %v255, %v257
  %v260 = vmul.u32 %v255, %v258
  %v261 = vmul.u32 %v256, %v257
  %v262 = vmul.u32 %v256, %v258
  %v263 = vshll.u32 %v260, 16
  %v264 = vshrl.u32 %v260, 16
  %v265 = vshll.u32 %v261, 16
  %v266 = vshrl.u32 %v261, 16
  %vm267 = vc.u32 %v259, %v263
  %v268 = vsel %vm267, 1, 0
  %v269 = vadd.s32 %v259, %v263
  %v270 = vadd.s32 %v262, %v268
  %vm271 = vc.u32 %v269, %v265
  %v272 = vsel %vm271, 1, 0
  %v273 = vadd.s32 %v269, %v265
  %v274 = vadd.s32 %v270, %v272
  %v275 = vadd.s32 %v274, %v264
  %v276 = vadd.s32 %v275, %v266
  %v277 = vmul.u32 %v232, %v223
  %v278 = vadd.s32 %v254, %v273
  %vm279 = vc.u32 %v254, %v273
  %v280 = vadd.s32 %v276, 1
  %v281 = vsel %vm279, %v280, %v276
  %v282 = vadd.s32 %v277, %v281
  %v283 = vadd.s32 %v282, 536870912
  %v284 = vshrl.u32 %v283, 30
  %v285 = vshll.u32 %v284, 30
  %v286 = vsub.s32 %v282, %v285
  %vm287 = vcmp.lt.s32.totalorder %v286, 0
  %v288 = vsub.s32 0, %v286
  %v289 = vsel %vm287, %v288, %v286
  %v290 = vclz %v289
  %v291 = vsub.s32 %v290, 2
  %vm292 = vcmp.gt.s32.totalorder 0, %v291
  %v293 = vsel %vm292, 0, %v291
  %v294 = vsub.s32 32, %v293
  %v295 = vshll.u32 %v286, %v293
  %v296 = vshrl.u32 %v278, %v294
  %v297 = vor.u32 %v295, %v296
  %v298 = vsub.s32 4294967266, %v293
  %v299 = vadd.s32 %v298, 127
  %v300 = vshll.u32 %v299, 23
  %v301 = vor.u32 4788187, %v300
  %v302 = vand.u32 2147483647, %v301
  %v304 = vcvt.s32.f32 %v297
  %v305 = vmul.f32 %v304, %v302
  %v306 = vxor.u32 %v305, 2147483648
  %v307 = vsel %vm186, %v306, %v305
  %v308 = vsub.s32 4, %v284
  %v309 = vsel %vm186, %v308, %v284
  %v310 = vsel %vm185, %v182, %v307
  %v311 = vsel %vm185, 0, %v309
  %v312 = vmul.f32 %v310, %v310
  %v313 = vmul.f32 %v312, -0.001358992
  %v314 = vadd.f32 %v313, 0.041655596
  %v315 = vmul.f32 %v312, %v314
  %v316 = vadd.f32 %v315, -0.4999988
  %v317 = vmul.f32 %v312, %v316
  %v318 = vadd.f32 1.0, %v317
  %v319 = vmul.f32 %v310, %v310
  %v320 = vmul.f32 %v319, -0.00019511016
  %v321 = vadd.f32 %v320, 0.008332121
  %v322 = vmul.f32 %v319, %v321
  %v323 = vadd.f32 %v322, -0.16666654
  %v324 = vmul.f32 %v319, %v323
  %v325 = vadd.f32 %v324, 1.0
  %v326 = vmul.f32 %v325, %v310
  %vm327 = vweird.f32 %v182
  %v328 = vadd.s32 %v311, 3
  %v329 = vand.u32 %v328, 3
  %vm330 = vcmp.lt.s32.totalorder %v329, 2
  %vm331 = vcmp.eq.s32.totalorder %v329, 0
  %v332 = vxor.u32 %v326, 2147483648
  %v333 = vsel %vm331, %v318, %v332
  %vm334 = vcmp.eq.s32.totalorder %v329, 2
  %v335 = vxor.u32 %v318, 2147483648
  %v336 = vsel %vm334, %v335, %v326
  %v337 = vsel %vm330, %v333, %v336
  %v338 = vsel %vm327, nan, %v337
  %339 = vst [vmem:[%s3] sm:$0xff] %v338
  // Predicated region
  $region14: #{positional_encoding.1} parent=0 // pred_check
    _
  $region15: #{positional_encoding.1} parent=0 // pred_check_branch
    %341 = sbr.rel (0) target = $region17
  $region16: #{positional_encoding.1} parent=0 // pred_region
    _
  $region17: #{positional_encoding.1} parent=0 // pred_fallthru
    _
  // Predicated region
  $region18: #{positional_encoding.1} parent=0 // pred_check
    _
  $region19: #{positional_encoding.1} parent=0 // pred_check_branch
    %343 = sbr.rel (0) target = $region21
  $region20: #{positional_encoding.1} parent=0 // pred_region
    _
  $region21: #{positional_encoding.1} parent=0 // pred_fallthru
    _

</llo_original>
